<compile_context>
chip_gen: v6e
topology: v6e:2x2x1
jax: 0.10.0
libtpu: 0.0.40
codegen_flags: <defaults>
</compile_context>

<pallas_src>
import jax
import jax.numpy as jnp
from jax import lax
from jax.experimental import pallas as pl
from jax.experimental.pallas import tpu as pltpu

BN_EPS = 1e-5
_LANE = 128
_LT_TARGET = 512                       # L-tile width (lanes); multiple of 128
_VMEM_LIMIT = 32 * 1024 * 1024         # raises v5e 16 MiB default; fits v7x 64 MiB


def _round_up(x, m):
    return (x + m - 1) // m * m


# -------------- pass 1: 1x1 conv + per-channel sum / sum-of-squares --------------
def _stats_kernel(w_ref, x_ref, stats_ref, sum_ref, sq_ref):
    l = pl.program_id(1)

    @pl.when(l == 0)
    def _():
        sum_ref[...] = jnp.zeros_like(sum_ref)
        sq_ref[...] = jnp.zeros_like(sq_ref)

    # Conv1d(kernel=1, bias=None) == per-batch channel matmul -> MXU
    y = jnp.dot(w_ref[...], x_ref[...].astype(jnp.float32),
                preferred_element_type=jnp.float32)            # (nf, LT)
    sum_ref[...] += jnp.sum(y, axis=1, keepdims=True)
    sq_ref[...] += jnp.sum(y * y, axis=1, keepdims=True)

    @pl.when(l == pl.num_programs(1) - 1)
    def _():
        stats_ref[:, 0:1] = sum_ref[...]
        stats_ref[:, 1:2] = sq_ref[...]


# -------------- pass 2: scale-folded conv + shift + ReLU --------------
def _apply_kernel(w_ref, shift_ref, x_ref, o_ref):
    y = jnp.dot(w_ref[...], x_ref[...].astype(jnp.float32),
                preferred_element_type=jnp.float32)            # (nf, LT)
    o_ref[...] = jnp.maximum(y + shift_ref[...], 0.0).astype(o_ref.dtype)


@jax.jit
def cbr_forward(x, w, gamma, beta):
    """x: (B, ni, L) NCL; w: (nf, ni); gamma/beta: (nf,).  Returns (B, nf, L)."""
    B, ni, L = x.shape
    nf = w.shape[0]

    # Lane-dense L tiling (pad up to a multiple of 128; zeros are exact for BN).
    if L > _LT_TARGET:
        l_pad = _round_up(L, _LT_TARGET)
        lt = _LT_TARGET
    else:
        l_pad = _round_up(L, _LANE)
        lt = l_pad
    x_p = x if l_pad == L else jnp.pad(x, ((0, 0), (0, 0), (0, l_pad - L)))
    n_l = l_pad // lt

    w_f32 = w.astype(jnp.float32)

    # ---- pass 1: per-batch partial sums (batch axis parallel across cores) ----
    stats = pl.pallas_call(
        _stats_kernel,
        out_shape=jax.ShapeDtypeStruct((B, nf, 2), jnp.float32),
        grid=(B, n_l),
        in_specs=[
            pl.BlockSpec((nf, ni), lambda b, l: (0, 0)),
            pl.BlockSpec((None, ni, lt), lambda b, l: (b, 0, l)),
        ],
        out_specs=pl.BlockSpec((None, nf, 2), lambda b, l: (b, 0, 0)),
        scratch_shapes=[
            pltpu.VMEM((nf, 1), jnp.float32),
            pltpu.VMEM((nf, 1), jnp.float32),
        ],
        compiler_params=pltpu.CompilerParams(
            dimension_semantics=("parallel", "arbitrary"),
            vmem_limit_bytes=_VMEM_LIMIT,
        ),
    )(w_f32, x_p)

    # ---- finish the tiny reduction, fold BN into per-channel scale/shift ----
    n = jnp.float32(B * L)                              # true count (excludes pad)
    sums = jnp.sum(stats, axis=0)                       # (nf, 2)
    mean = sums[:, 0] / n
    var = jnp.maximum(sums[:, 1] / n - mean * mean, 0.0)   # biased var (BN training)
    scale = gamma.astype(jnp.float32) * lax.rsqrt(var + BN_EPS)
    shift = (beta.astype(jnp.float32) - mean * scale).reshape(nf, 1)
    w_scaled = w_f32 * scale[:, None]                   # fold BN scale into weights

    # ---- pass 2: normalize + ReLU, written straight into the NCL output ----
    out_p = pl.pallas_call(
        _apply_kernel,
        out_shape=jax.ShapeDtypeStruct((B, nf, l_pad), x.dtype),
        grid=(B, n_l),
        in_specs=[
            pl.BlockSpec((nf, ni), lambda b, l: (0, 0)),
            pl.BlockSpec((nf, 1), lambda b, l: (0, 0)),
            pl.BlockSpec((None, ni, lt), lambda b, l: (b, 0, l)),
        ],
        out_specs=pl.BlockSpec((None, nf, lt), lambda b, l: (b, 0, l)),
        compiler_params=pltpu.CompilerParams(
            dimension_semantics=("parallel", "parallel"),
            vmem_limit_bytes=_VMEM_LIMIT,
        ),
    )(w_scaled, shift, x_p)

    return out_p if l_pad == L else out_p[:, :, :L]


def _reference(x, w, gamma, beta):
    y = jnp.einsum("fi,bil->bfl", w, x)
    mean = jnp.mean(y, axis=(0, 2), keepdims=True)
    var = jnp.mean((y - mean) ** 2, axis=(0, 2), keepdims=True)
    y_hat = (y - mean) * lax.rsqrt(var + BN_EPS)
    return jnp.maximum(y_hat * gamma[None, :, None] + beta[None, :, None], 0.0)


if __name__ == "__main__":
    # Small shapes consistent with the module: batch=2, ni=4, nf=8, length=16
    B, NI, NF, L = 2, 4, 8, 16

    key = jax.random.PRNGKey(0)
    kx, kw = jax.random.split(key)

    x = jax.random.normal(kx, (B, NI, L), dtype=jnp.float32)
    # Deterministic synthetic parameter init (not a checkpoint load).
    w = 0.5 * jax.random.normal(kw, (NF, NI), dtype=jnp.float32)  # Conv1d (nf, ni, 1) squeezed
    gamma = jnp.ones((NF,), dtype=jnp.float32)   # BatchNorm1d default weight init
    beta = jnp.zeros((NF,), dtype=jnp.float32)   # BatchNorm1d default bias init

    out = cbr_forward(x, w, gamma, beta)
    out = jax.block_until_ready(out)
    assert out.shape == (B, NF, L)

    ref = _reference(x, w, gamma, beta)
    assert jnp.allclose(out, ref, atol=1e-3, rtol=1e-3), "mismatch vs reference"

    print("KERNEL_OK")
</pallas_src>

<mosaic_0001>
module attributes {stable_mosaic.version = 11 : i64} {
  func.func @_stats_kernel(%arg0: i32, %arg1: i32, %arg2: memref<8x4xf32, #tpu.memory_space<vmem>>, %arg3: memref<1x4x128xf32, #tpu.memory_space<vmem>>, %arg4: memref<1x8x2xf32, #tpu.memory_space<vmem>>, %arg5: memref<8x1xf32, #tpu.memory_space<vmem>>, %arg6: memref<8x1xf32, #tpu.memory_space<vmem>>) attributes {dimension_semantics = [#tpu.dimension_semantics<parallel>, #tpu.dimension_semantics<arbitrary>], iteration_bounds = array<i64: 2, 1>, scalar_prefetch = 0 : i64, scratch_operands = 2 : i64, tpu.core_type = #tpu.core_type<tc>, window_params = [{pipeline_mode = #tpu.pipeline_mode<synchronous>, transform_indices = @transform_0, window_bounds = array<i64: 8, 4>}, {transform_indices = @transform_1, window_bounds = array<i64: 1, 4, 128>}, {transform_indices = @transform_2, window_bounds = array<i64: 1, 8, 2>}]} {
    %c0_i32 = arith.constant 0 : i32
    %0 = arith.cmpi eq, %arg1, %c0_i32 : i32
    %1 = arith.extui %0 : i1 to i32
    %c0_i32_0 = arith.constant 0 : i32
    %2 = arith.cmpi ne, %1, %c0_i32_0 : i32
    scf.if %2 {
      %cst_17 = arith.constant 0.000000e+00 : f32
      %21 = vector.broadcast %cst_17 : f32 to vector<8x1xf32>
      %c0_18 = arith.constant 0 : index
      %c0_19 = arith.constant 0 : index
      %22 = vector.load %arg5[%c0_18, %c0_19] : memref<8x1xf32, #tpu.memory_space<vmem>>, vector<8x1xf32>
      tpu.vector_store %arg5[%c0_18, %c0_19], %21 {strides = array<i32>} : memref<8x1xf32, #tpu.memory_space<vmem>>, vector<8x1xf32>,
      %cst_20 = arith.constant 0.000000e+00 : f32
      %23 = vector.broadcast %cst_20 : f32 to vector<8x1xf32>
      %c0_21 = arith.constant 0 : index
      %c0_22 = arith.constant 0 : index
      %24 = vector.load %arg6[%c0_21, %c0_22] : memref<8x1xf32, #tpu.memory_space<vmem>>, vector<8x1xf32>
      tpu.vector_store %arg6[%c0_21, %c0_22], %23 {strides = array<i32>} : memref<8x1xf32, #tpu.memory_space<vmem>>, vector<8x1xf32>,
    } else {
    }
    %c0 = arith.constant 0 : index
    %c0_1 = arith.constant 0 : index
    %3 = vector.load %arg2[%c0, %c0_1] : memref<8x4xf32, #tpu.memory_space<vmem>>, vector<8x4xf32>
    %c0_2 = arith.constant 0 : index
    %c0_3 = arith.constant 0 : index
    %c0_4 = arith.constant 0 : index
    %4 = vector.load %arg3[%c0_2, %c0_3, %c0_4] : memref<1x4x128xf32, #tpu.memory_space<vmem>>, vector<1x4x128xf32>
    %5 = vector.shape_cast %4 : vector<1x4x128xf32> to vector<4x128xf32>
    %cst = arith.constant dense<0.000000e+00> : vector<8x128xf32>
    %6 = tpu.matmul %3, %5, %cst {dimension_numbers = #tpu.dot_dimension_numbers<[1], [0], [0], [1], [0, 0, 1, 1], [], []>} : vector<8x4xf32>, vector<4x128xf32>, vector<8x128xf32> -> vector<8x128xf32>
    %c0_5 = arith.constant 0 : index
    %c0_6 = arith.constant 0 : index
    %7 = vector.load %arg5[%c0_5, %c0_6] : memref<8x1xf32, #tpu.memory_space<vmem>>, vector<8x1xf32>
    %cst_7 = arith.constant dense<0.000000e+00> : vector<8xf32>
    %8 = vector.multi_reduction <add>, %6, %cst_7 [1] : vector<8x128xf32> to vector<8xf32>
    %9 = vector.shape_cast %8 : vector<8xf32> to vector<8x1xf32>
    %10 = arith.addf %7, %9 : vector<8x1xf32>
    %c0_8 = arith.constant 0 : index
    %c0_9 = arith.constant 0 : index
    %11 = vector.load %arg5[%c0_8, %c0_9] : memref<8x1xf32, #tpu.memory_space<vmem>>, vector<8x1xf32>
    tpu.vector_store %arg5[%c0_8, %c0_9], %10 {strides = array<i32>} : memref<8x1xf32, #tpu.memory_space<vmem>>, vector<8x1xf32>,
    %c0_10 = arith.constant 0 : index
    %c0_11 = arith.constant 0 : index
    %12 = vector.load %arg6[%c0_10, %c0_11] : memref<8x1xf32, #tpu.memory_space<vmem>>, vector<8x1xf32>
    %13 = arith.mulf %6, %6 : vector<8x128xf32>
    %cst_12 = arith.constant dense<0.000000e+00> : vector<8xf32>
    %14 = vector.multi_reduction <add>, %13, %cst_12 [1] : vector<8x128xf32> to vector<8xf32>
    %15 = vector.shape_cast %14 : vector<8xf32> to vector<8x1xf32>
    %16 = arith.addf %12, %15 : vector<8x1xf32>
    %c0_13 = arith.constant 0 : index
    %c0_14 = arith.constant 0 : index
    %17 = vector.load %arg6[%c0_13, %c0_14] : memref<8x1xf32, #tpu.memory_space<vmem>>, vector<8x1xf32>
    tpu.vector_store %arg6[%c0_13, %c0_14], %16 {strides = array<i32>} : memref<8x1xf32, #tpu.memory_space<vmem>>, vector<8x1xf32>,
    %c0_i32_15 = arith.constant 0 : i32
    %18 = arith.cmpi eq, %arg1, %c0_i32_15 : i32
    %19 = arith.extui %18 : i1 to i32
    %c0_i32_16 = arith.constant 0 : i32
    %20 = arith.cmpi ne, %19, %c0_i32_16 : i32
    scf.if %20 {
      %c0_17 = arith.constant 0 : index
      %c0_18 = arith.constant 0 : index
      %21 = vector.load %arg5[%c0_17, %c0_18] : memref<8x1xf32, #tpu.memory_space<vmem>>, vector<8x1xf32>
      %c0_19 = arith.constant 0 : index
      %c0_20 = arith.constant 0 : index
      %c0_21 = arith.constant 0 : index
      %22 = vector.load %arg4[%c0_19, %c0_20, %c0_21] : memref<1x8x2xf32, #tpu.memory_space<vmem>>, vector<1x8x1xf32>
      %23 = vector.shape_cast %22 : vector<1x8x1xf32> to vector<8x1xf32>
      %24 = vector.shape_cast %21 : vector<8x1xf32> to vector<1x8x1xf32>
      tpu.vector_store %arg4[%c0_19, %c0_20, %c0_21], %24 {strides = array<i32>} : memref<1x8x2xf32, #tpu.memory_space<vmem>>, vector<1x8x1xf32>,
      %c0_22 = arith.constant 0 : index
      %c0_23 = arith.constant 0 : index
      %25 = vector.load %arg6[%c0_22, %c0_23] : memref<8x1xf32, #tpu.memory_space<vmem>>, vector<8x1xf32>
      %c0_24 = arith.constant 0 : index
      %c0_25 = arith.constant 0 : index
      %c1 = arith.constant 1 : index
      %26 = vector.load %arg4[%c0_24, %c0_25, %c1] : memref<1x8x2xf32, #tpu.memory_space<vmem>>, vector<1x8x1xf32>
      %27 = vector.shape_cast %26 : vector<1x8x1xf32> to vector<8x1xf32>
      %28 = vector.shape_cast %25 : vector<8x1xf32> to vector<1x8x1xf32>
      tpu.vector_store %arg4[%c0_24, %c0_25, %c1], %28 {strides = array<i32>} : memref<1x8x2xf32, #tpu.memory_space<vmem>>, vector<1x8x1xf32>,
    } else {
    }
    return
  }
  func.func @transform_0(%arg0: i32, %arg1: i32) -> (i32, i32) {
    %c0_i32 = arith.constant 0 : i32
    %c0_i32_0 = arith.constant 0 : i32
    %c0_i32_1 = arith.constant 0 : i32
    return %c0_i32, %c0_i32_0 : i32, i32
  }
  func.func @transform_1(%arg0: i32, %arg1: i32) -> (i32, i32, i32) {
    %c0_i32 = arith.constant 0 : i32
    %c0_i32_0 = arith.constant 0 : i32
    return %arg0, %c0_i32, %arg1 : i32, i32, i32
  }
  func.func @transform_2(%arg0: i32, %arg1: i32) -> (i32, i32, i32) {
    %c0_i32 = arith.constant 0 : i32
    %c0_i32_0 = arith.constant 0 : i32
    %c0_i32_1 = arith.constant 0 : i32
    return %arg0, %c0_i32, %c0_i32_0 : i32, i32, i32
  }
}

module attributes {stable_mosaic.version = 11 : i64} {
  func.func @_apply_kernel(%arg0: i32, %arg1: i32, %arg2: memref<8x4xf32, #tpu.memory_space<vmem>>, %arg3: memref<8x1xf32, #tpu.memory_space<vmem>>, %arg4: memref<1x4x128xf32, #tpu.memory_space<vmem>>, %arg5: memref<1x8x128xf32, #tpu.memory_space<vmem>>) attributes {dimension_semantics = [#tpu.dimension_semantics<parallel>, #tpu.dimension_semantics<parallel>], iteration_bounds = array<i64: 2, 1>, scalar_prefetch = 0 : i64, scratch_operands = 0 : i64, tpu.core_type = #tpu.core_type<tc>, window_params = [{pipeline_mode = #tpu.pipeline_mode<synchronous>, transform_indices = @transform_0, window_bounds = array<i64: 8, 4>}, {pipeline_mode = #tpu.pipeline_mode<synchronous>, transform_indices = @transform_1, window_bounds = array<i64: 8, 1>}, {transform_indices = @transform_2, window_bounds = array<i64: 1, 4, 128>}, {transform_indices = @transform_3, window_bounds = array<i64: 1, 8, 128>}]} {
    %c0 = arith.constant 0 : index
    %c0_0 = arith.constant 0 : index
    %0 = vector.load %arg2[%c0, %c0_0] : memref<8x4xf32, #tpu.memory_space<vmem>>, vector<8x4xf32>
    %c0_1 = arith.constant 0 : index
    %c0_2 = arith.constant 0 : index
    %c0_3 = arith.constant 0 : index
    %1 = vector.load %arg4[%c0_1, %c0_2, %c0_3] : memref<1x4x128xf32, #tpu.memory_space<vmem>>, vector<1x4x128xf32>
    %2 = vector.shape_cast %1 : vector<1x4x128xf32> to vector<4x128xf32>
    %cst = arith.constant dense<0.000000e+00> : vector<8x128xf32>
    %3 = tpu.matmul %0, %2, %cst {dimension_numbers = #tpu.dot_dimension_numbers<[1], [0], [0], [1], [0, 0, 1, 1], [], []>} : vector<8x4xf32>, vector<4x128xf32>, vector<8x128xf32> -> vector<8x128xf32>
    %c0_4 = arith.constant 0 : index
    %c0_5 = arith.constant 0 : index
    %4 = vector.load %arg3[%c0_4, %c0_5] : memref<8x1xf32, #tpu.memory_space<vmem>>, vector<8x1xf32>
    %5 = vector.broadcast %4 : vector<8x1xf32> to vector<8x128xf32>
    %6 = arith.addf %3, %5 : vector<8x128xf32>
    %cst_6 = arith.constant 0.000000e+00 : f32
    %7 = vector.broadcast %cst_6 : f32 to vector<8x128xf32>
    %8 = arith.maximumf %6, %7 : vector<8x128xf32>
    %c0_7 = arith.constant 0 : index
    %c0_8 = arith.constant 0 : index
    %c0_9 = arith.constant 0 : index
    %9 = vector.load %arg5[%c0_7, %c0_8, %c0_9] : memref<1x8x128xf32, #tpu.memory_space<vmem>>, vector<1x8x128xf32>
    %10 = vector.shape_cast %9 : vector<1x8x128xf32> to vector<8x128xf32>
    %11 = vector.shape_cast %8 : vector<8x128xf32> to vector<1x8x128xf32>
    tpu.vector_store %arg5[%c0_7, %c0_8, %c0_9], %11 {strides = array<i32>} : memref<1x8x128xf32, #tpu.memory_space<vmem>>, vector<1x8x128xf32>,
    return
  }
  func.func @transform_0(%arg0: i32, %arg1: i32) -> (i32, i32) {
    %c0_i32 = arith.constant 0 : i32
    %c0_i32_0 = arith.constant 0 : i32
    %c0_i32_1 = arith.constant 0 : i32
    return %c0_i32, %c0_i32_0 : i32, i32
  }
  func.func @transform_1(%arg0: i32, %arg1: i32) -> (i32, i32) {
    %c0_i32 = arith.constant 0 : i32
    %c0_i32_0 = arith.constant 0 : i32
    %c0_i32_1 = arith.constant 0 : i32
    return %c0_i32, %c0_i32_0 : i32, i32
  }
  func.func @transform_2(%arg0: i32, %arg1: i32) -> (i32, i32, i32) {
    %c0_i32 = arith.constant 0 : i32
    %c0_i32_0 = arith.constant 0 : i32
    return %arg0, %c0_i32, %arg1 : i32, i32, i32
  }
  func.func @transform_3(%arg0: i32, %arg1: i32) -> (i32, i32, i32) {
    %c0_i32 = arith.constant 0 : i32
    %c0_i32_0 = arith.constant 0 : i32
    return %arg0, %c0_i32, %arg1 : i32, i32, i32
  }
}

</mosaic_0001>

<llo_original>
// kernel: cbr_forward.3
$region0: #{cbr_forward.3}
  #allocation0 [shape = 'u32[]', space=smem, size = 0x4, offset = 0x4, fixed_abs, tag = 'smem constant byte address 0x4 - core index']
  #allocation1 [shape = 'u32[144,128]{1,0:T(1,128)}', space=vmem, size = 0x12000, scoped, tag = 'internal scratch']
  %s0 = inlined_call_operand.vmem [shape: f32[8,4], index: 0, kind: input, shape index: {}]
  %s1 = inlined_call_operand.vmem [shape: f32[8,1], index: 1, kind: input, shape index: {}]
  %s2 = inlined_call_operand.vmem [shape: f32[2,4,128], index: 2, kind: input, shape index: {}]
  %s3 = inlined_call_operand.hbm [shape: f32[2,8,128], index: 3, kind: output, shape index: {}]
  %s4 = sld [smem:[#allocation0]]
  $region45: #{cbr_forward.3} parent=0
    _
  %s6 = ssub.s32 1, %s4
  %s7 = scalar_select 0, %s6, %s4
  $region1: #{cbr_forward.3} parent=0
    #allocation2 [shape = 'u8[8192]{0}', space=vmem, size = 0x2000, scoped, tag = 'output window, operand 0']
    #allocation3 [shape = 's32[2]{0}', space=sflag, size = 0x8, scoped, tag = 'scoped memory for cbr_forward.3']
    %8 = vsyncpa [#allocation3], 0
    %s9 = scalar_lea.sflag [#allocation3], 1
    %10 = vsyncpa %s9, 0
    loop: start=0, step=1, limit=4
    $region2: #{cbr_forward.3} parent=1 // loop_pre_header
      _
    $region3: #{cbr_forward.3} parent=1 // loop_header
      %s12 = sphi 0, %s16
      %p13 = scmp.ge.s32.totalorder %s12, 4
      %s19 = sphi 0, %s31
      %s20 = sphi 0, %s27
      %s21 = sphi 0, %s19
      %s22 = sphi 0, %s20
      %s23 = sphi 0, %s21
      %s24 = sphi 0, %s22
      %s32 = sphi 0, %s32
      %s34 = sphi 0, %s32
      %s35 = sphi 0, %s34
      %s49 = sphi 0, %s35
      %s53 = sphi 0, %s53
      %s55 = sphi 0, %s53
      %s56 = sphi 0, %s55
      %s70 = sphi 0, %s56
      %s78 = sphi 0, %s80
      %s81 = sphi 0, %s78
      %s82 = sphi 0, %s81
      %s98 = sphi 0, %s82
      %s106 = sphi 0, %s108
      %s109 = sphi 0, %s106
      %s110 = sphi 0, %s109
      %s126 = sphi 0, %s110
    $region4: #{cbr_forward.3} parent=1 // loop_header_branch
      %15 = sbr.rel (%p13) target = $region8
    $region5: #{cbr_forward.3} parent=1 // loop_body
      %s17 = ssub.s32 %s12, 1
      %s18 = ssub.s32 %s12, 2
      %s25 = sadd.s32 1, %s20
      %p26 = scmp.ge.s32.totalorder %s25, 1
      %s27 = scalar_select %p26, 0, %s25
      %s28 = sadd.s32 1, %s19
      %s29 = scalar_select %p26, %s28, %s19
      %p30 = scmp.ge.s32.totalorder %s29, 2
      %s31 = scalar_select %p30, 0, %s29
      %s33 = sadd.s32 %s32, 1
      %p36 = scmp.eq.s32.totalorder %s12, 1
      %p37 = scmp.ne.s32.totalorder %s32, %s34
      %p38 = scmp.eq.s32.totalorder %s12, 0
      %p39 = por %p37, %p38
      %p40 = scmp.ne.s32.totalorder %s32, %s34
      %p41 = scmp.eq.s32.totalorder %s17, 1
      %p42 = por %p40, %p41
      %p43 = scmp.ne.s32.totalorder %s34, %s35
      %p44 = scmp.eq.s32.totalorder %s17, 0
      %p45 = por %p43, %p44
      %p46 = scmp.ne.s32.totalorder %s34, %s35
      %p47 = scmp.eq.s32.totalorder %s18, 1
      %p48 = por %p46, %p47
      %p50 = scmp.ne.s32.totalorder %s35, %s49
      %p51 = scmp.eq.s32.totalorder %s18, 0
      %p52 = por %p50, %p51
      %s54 = sadd.s32 %s53, 1
      %p57 = scmp.eq.s32.totalorder %s12, 1
      %p58 = scmp.ne.s32.totalorder %s53, %s55
      %p59 = scmp.eq.s32.totalorder %s12, 0
      %p60 = por %p58, %p59
      %p61 = scmp.ne.s32.totalorder %s53, %s55
      %p62 = scmp.eq.s32.totalorder %s17, 1
      %p63 = por %p61, %p62
      %p64 = scmp.ne.s32.totalorder %s55, %s56
      %p65 = scmp.eq.s32.totalorder %s17, 0
      %p66 = por %p64, %p65
      %p67 = scmp.ne.s32.totalorder %s55, %s56
      %p68 = scmp.eq.s32.totalorder %s18, 1
      %p69 = por %p67, %p68
      %p71 = scmp.ne.s32.totalorder %s56, %s70
      %p72 = scmp.eq.s32.totalorder %s18, 0
      %p73 = por %p71, %p72
      %s74 = ssub.s32 %s19, %s31
      %s75 = ssub.s32 %s20, %s27
      %s76 = sor.u32 %s74, %s75
      %p77 = scmp.eq.s32.totalorder %s76, 0
      %s79 = sadd.s32 %s78, 1
      %s80 = scalar_select %p77, %s78, %s79
      %p83 = pneg %p77
      %p84 = scmp.eq.s32.totalorder %s12, 1
      %p85 = por %p83, %p84
      %p86 = scmp.ne.s32.totalorder %s78, %s81
      %p87 = scmp.eq.s32.totalorder %s12, 0
      %p88 = por %p86, %p87
      %p89 = scmp.ne.s32.totalorder %s78, %s81
      %p90 = scmp.eq.s32.totalorder %s17, 1
      %p91 = por %p89, %p90
      %p92 = scmp.ne.s32.totalorder %s81, %s82
      %p93 = scmp.eq.s32.totalorder %s17, 0
      %p94 = por %p92, %p93
      %p95 = scmp.ne.s32.totalorder %s81, %s82
      %p96 = scmp.eq.s32.totalorder %s18, 1
      %p97 = por %p95, %p96
      %p99 = scmp.ne.s32.totalorder %s82, %s98
      %p100 = scmp.eq.s32.totalorder %s18, 0
      %p101 = por %p99, %p100
      %s102 = ssub.s32 %s19, %s31
      %s103 = ssub.s32 %s20, %s27
      %s104 = sor.u32 %s102, %s103
      %p105 = scmp.eq.s32.totalorder %s104, 0
      %s107 = sadd.s32 %s106, 1
      %s108 = scalar_select %p105, %s106, %s107
      %p111 = pneg %p105
      %p112 = scmp.eq.s32.totalorder %s12, 1
      %p113 = por %p111, %p112
      %p114 = scmp.ne.s32.totalorder %s106, %s109
      %p115 = scmp.eq.s32.totalorder %s12, 0
      %p116 = por %p114, %p115
      %p117 = scmp.ne.s32.totalorder %s106, %s109
      %p118 = scmp.eq.s32.totalorder %s17, 1
      %p119 = por %p117, %p118
      %p120 = scmp.ne.s32.totalorder %s109, %s110
      %p121 = scmp.eq.s32.totalorder %s17, 0
      %p122 = por %p120, %p121
      %p123 = scmp.ne.s32.totalorder %s109, %s110
      %p124 = scmp.eq.s32.totalorder %s18, 1
      %p125 = por %p123, %p124
      %p127 = scmp.ne.s32.totalorder %s110, %s126
      %p128 = scmp.eq.s32.totalorder %s18, 0
      %p129 = por %p127, %p128
      %p130 = scmp.le.s32.totalorder 1, %s12
      %p131 = scmp.lt.s32.totalorder %s12, 3
      %p132 = pnand %p130, %p131
      %p133 = pneg %p132
      // Predicated region
      $region9: #{cbr_forward.3} parent=5 // pred_check
        _
      $region10: #{cbr_forward.3} parent=5 // pred_check_branch
        %135 = sbr.rel (%p132) target = $region12
      $region11: #{cbr_forward.3} parent=5 // pred_region
        %s136 = ssub.s32 %s12, 1
        // Predicated region
        $region13: #{cbr_forward.3} parent=11 // pred_check
          %p137 = pneg %p45
        $region14: #{cbr_forward.3} parent=11 // pred_check_branch
          %139 = sbr.rel (%p137) target = $region16
        $region15: #{cbr_forward.3} parent=11 // pred_region
          _
        $region16: #{cbr_forward.3} parent=11 // pred_fallthru
          _
        // Predicated region
        $region17: #{cbr_forward.3} parent=11 // pred_check
          %p140 = pneg %p66
        $region18: #{cbr_forward.3} parent=11 // pred_check_branch
          %142 = sbr.rel (%p140) target = $region20
        $region19: #{cbr_forward.3} parent=11 // pred_region
          _
        $region20: #{cbr_forward.3} parent=11 // pred_fallthru
          _
      $region12: #{cbr_forward.3} parent=5 // pred_fallthru
        _
      %p143 = scmp.lt.s32.totalorder %s12, 2
      // Predicated region
      $region21: #{cbr_forward.3} parent=5 // pred_check
        %p144 = pneg %p143
      $region22: #{cbr_forward.3} parent=5 // pred_check_branch
        %146 = sbr.rel (%p144) target = $region24
      $region23: #{cbr_forward.3} parent=5 // pred_region
        // Predicated region
        $region25: #{cbr_forward.3} parent=23 // pred_check
          %p147 = pneg %p88
        $region26: #{cbr_forward.3} parent=23 // pred_check_branch
          %149 = sbr.rel (%p147) target = $region28
        $region27: #{cbr_forward.3} parent=23 // pred_region
          %p150 = scmp.lt.s32.totalorder %s19, 1
          %s151 = scalar_select %p150, %s19, 1
          %p152 = scmp.lt.s32.totalorder %s20, 0
          %s153 = scalar_select %p152, %s20, 0
          %s154 = sadd.s32 %s153, %s151
          %s155 = smul.addr %s154, 4
          %s156 = scalar_lea.vmem %s2, %s155
        $region28: #{cbr_forward.3} parent=23 // pred_fallthru
          _
      $region24: #{cbr_forward.3} parent=5 // pred_fallthru
        _
      %p157 = scmp.le.s32.totalorder 1, %s12
      %p158 = scmp.lt.s32.totalorder %s12, 3
      %p159 = pnand %p157, %p158
      %p160 = pneg %p159
      // Predicated region
      $region29: #{cbr_forward.3} parent=5 // pred_check
        _
      $region30: #{cbr_forward.3} parent=5 // pred_check_branch
        %162 = sbr.rel (%p159) target = $region32
      $region31: #{cbr_forward.3} parent=5 // pred_region
        %s163 = ssub.s32 %s12, 1
        %p164 = pneg %p45
        %p165 = pneg %p42
        %p166 = pneg %p66
        %p167 = pneg %p63
        %p168 = scmp.lt.s32.totalorder %s21, 1
        %s169 = scalar_select %p168, %s21, 1
        %p170 = scmp.lt.s32.totalorder %s22, 0
        %s171 = scalar_select %p170, %s22, 0
        %s172 = sadd.s32 %s171, %s169
        %s173 = smul.addr %s172, 4
        %s174 = scalar_lea.vmem %s2, %s173
        %p175 = pneg %p94
        %p176 = pneg %p91
        %p177 = pneg %p122
        %p178 = pneg %p119
        %s179 = sand.u32 %s109, 1
        %s180 = scalar_lea.sflag [#allocation3], %s179
        %s181 = sand.u32 %s109, 1
        %s182 = smul.addr %s181, 8
        %s183 = scalar_lea.vmem [#allocation2], %s182
        %p184 = scmp.lt.s32.totalorder %s21, 1
        %s185 = scalar_select %p184, %s21, 1
        %p186 = scmp.lt.s32.totalorder %s22, 0
        %s187 = scalar_select %p186, %s22, 0
        %s188 = sadd.s32 %s187, %s185
        %s189 = smul.addr %s188, 4
        %s190 = scalar_lea.vmem %s2, %s189
        %v191 = vld [vmem:[%s0] sm:$0xff]
        %v192 = vld [vmem:[%s190] sm:$0xf]
        %v193 = vld [vmem:[%s1] sm:$0xff]
        %195 = vset.pattern.permute.xlu0 0
        %196 = vperm.xlu0 %195, %v193
        %v197 = vpop.permute.xlu0 %196
        %vm199 = vcmask 31744
        %v201 = vsel %vm199, %v191, 0
        %vm203 = vcmask 1043456
        %v205 = vsel %vm203, %v192, 0
        %207 = vmatprep.subr.mxu0 0.0
        %208 = vmatpush1.msra.mxu0 0.0
        %209 = vmatprep.subr.mxu0 0.0
        %210 = vmatpush1.msra.mxu0 0.0
        %211 = vmatprep.subr.mxu0 0.0
        %212 = vmatpush1.msra.mxu0 0.0
        %213 = vmatprep.subr.mxu0 0.0
        %214 = vmatpush1.msra.mxu0 0.0
        %215 = vmatprep.subr.mxu0 0.0
        %216 = vmatpush1.msra.mxu0 0.0
        %217 = vmatprep.subr.mxu0 0.0
        %218 = vmatpush1.msra.mxu0 0.0
        %219 = vmatprep.subr.mxu0 0.0
        %220 = vmatpush1.msra.mxu0 0.0
        %221 = vmatprep.subr.mxu0 0.0
        %222 = vmatpush1.msra.mxu0 0.0
        %223 = vmatprep.subr.mxu0 0.0
        %224 = vmatpush1.msra.mxu0 0.0
        %225 = vmatprep.subr.mxu0 0.0
        %226 = vmatpush1.msra.mxu0 0.0
        %227 = vmatprep.subr.mxu0 0.0
        %228 = vmatpush1.msra.mxu0 0.0
        %229 = vmatprep.subr.mxu0 0.0
        %230 = vmatpush1.msra.mxu0 0.0
        %231 = vmatprep.subr.mxu0 0.0
        %232 = vmatpush1.msra.mxu0 0.0
        %233 = vmatprep.subr.mxu0 0.0
        %234 = vmatpush1.msra.mxu0 0.0
        %235 = vmatprep.subr.mxu0 0.0
        %236 = vmatpush1.msra.mxu0 0.0
        %237 = vmatprep.subr.mxu0 0.0
        %238 = vmatpush1.msra.mxu0 %v205
        %239 = vmatprep.subr.mxu0 0.0
        %240 = vmatpush2.msra.mxu0 0.0
        %241 = vmatprep.subr.mxu0 0.0
        %242 = vmatpush2.msra.mxu0 0.0
        %243 = vmatprep.subr.mxu0 0.0
        %244 = vmatpush2.msra.mxu0 0.0
        %245 = vmatprep.subr.mxu0 0.0
        %246 = vmatpush2.msra.mxu0 0.0
        %247 = vmatprep.subr.mxu0 0.0
        %248 = vmatpush2.msra.mxu0 0.0
        %249 = vmatprep.subr.mxu0 0.0
        %250 = vmatpush2.msra.mxu0 0.0
        %251 = vmatprep.subr.mxu0 0.0
        %252 = vmatpush2.msra.mxu0 0.0
        %253 = vmatprep.subr.mxu0 0.0
        %254 = vmatpush2.msra.mxu0 0.0
        %255 = vmatprep.subr.mxu0 0.0
        %256 = vmatpush2.msra.mxu0 0.0
        %257 = vmatprep.subr.mxu0 0.0
        %258 = vmatpush2.msra.mxu0 0.0
        %259 = vmatprep.subr.mxu0 0.0
        %260 = vmatpush2.msra.mxu0 0.0
        %261 = vmatprep.subr.mxu0 0.0
        %262 = vmatpush2.msra.mxu0 0.0
        %263 = vmatprep.subr.mxu0 0.0
        %264 = vmatpush2.msra.mxu0 0.0
        %265 = vmatprep.subr.mxu0 0.0
        %266 = vmatpush2.msra.mxu0 0.0
        %267 = vmatprep.subr.mxu0 0.0
        %268 = vmatpush2.msra.mxu0 0.0
        %269 = vmatprep.subr.mxu0 0.0
        %270 = vmatpush2.msra.mxu0 0.0
        %271 = vmatprep.mubr.f32.mxu0 0.0
        %272 = vmatmul.mubr.f32.gmra.mxu0 %v201
        %v273 = vpop.f32.mrf.mxu0
        %v274 = vadd.f32 %v197, %v273
        %v275 = vpop.f32.mrf.mxu0
        %276 = vdwg.mxu0
        %v277 = vmax.f32 %v274, 0.0
        %278 = vst [vmem:[%s183] sm:$0xff] %v277
        %s279 = sand.u32 %s109, 1
        %s280 = scalar_lea.sflag [#allocation3], %s279
        %s281 = sand.u32 %s109, 1
        %s282 = smul.addr %s281, 8
        %s283 = scalar_lea.vmem [#allocation2], %s282
        // Predicated region
        $region33: #{cbr_forward.3} parent=31 // pred_check
          %p284 = pneg %p119
        $region34: #{cbr_forward.3} parent=31 // pred_check_branch
          %286 = sbr.rel (%p284) target = $region36
        $region35: #{cbr_forward.3} parent=31 // pred_region
          %s288 = ssub.s32 128, 128
          %289 = vsyncadd %s280, %s288
          %s290 = sadd.s32 %s22, %s21
          %s291 = smul.addr %s290, 128
          %s292 = scalar_lea.hbm %s3, %s291
          %s294 = sshll.u32 %s283, 4
          %s295 = int_to_ptr.vmem [resolvable:$true] %s294
          %297 = dma.vmem_to_hbm [thread:$0]  %s295, 128, %s292, %s280
        $region36: #{cbr_forward.3} parent=31 // pred_fallthru
          _
      $region32: #{cbr_forward.3} parent=5 // pred_fallthru
        _
      %p298 = scmp.le.s32.totalorder 2, %s12
      // Predicated region
      $region37: #{cbr_forward.3} parent=5 // pred_check
        %p299 = pneg %p298
      $region38: #{cbr_forward.3} parent=5 // pred_check_branch
        %301 = sbr.rel (%p299) target = $region40
      $region39: #{cbr_forward.3} parent=5 // pred_region
        %s302 = ssub.s32 %s12, 2
        // Predicated region
        $region41: #{cbr_forward.3} parent=39 // pred_check
          %p303 = pneg %p125
        $region42: #{cbr_forward.3} parent=39 // pred_check_branch
          %305 = sbr.rel (%p303) target = $region44
        $region43: #{cbr_forward.3} parent=39 // pred_region
          %s306 = sand.u32 %s110, 1
          %s307 = scalar_lea.sflag [#allocation3], %s306
          %s308 = sand.u32 %s110, 1
          %s309 = smul.addr %s308, 8
          %s310 = scalar_lea.vmem [#allocation2], %s309
          %311 = dma.done %s307, 128
        $region44: #{cbr_forward.3} parent=39 // pred_fallthru
          _
      $region40: #{cbr_forward.3} parent=5 // pred_fallthru
        _
    $region6: #{cbr_forward.3} parent=1 // loop_footer
      %s16 = sadd.s32 1, %s12
    $region7: #{cbr_forward.3} parent=1 // loop_footer_branch
      %11 = sbr.rel target = $region3
    $region8: #{cbr_forward.3} parent=1 // loop_exit
      _
    %312 = vsyncpa [#allocation3], 1
    %s313 = scalar_lea.sflag [#allocation3], 1
    %314 = vsyncpa %s313, 1

// kernel: cbr_forward.2
$region0: #{cbr_forward.2}
  #allocation0 [shape = 'u32[]', space=smem, size = 0x4, offset = 0x4, fixed_abs, tag = 'smem constant byte address 0x4 - core index']
  #allocation1 [shape = 'u32[144,128]{1,0:T(1,128)}', space=vmem, size = 0x12000, scoped, tag = 'internal scratch']
  #allocation2 [shape = 'f32[8,1]{1,0:T(8,128)}', space=vmem, size = 0x1000, scoped, tag = 'scratch operand']
  #allocation3 [shape = 'f32[8,1]{1,0:T(8,128)}', space=vmem, size = 0x1000, scoped, tag = 'scratch operand']
  %s0 = inlined_call_operand.vmem [shape: f32[8,4], index: 0, kind: input, shape index: {}]
  %s1 = inlined_call_operand.vmem [shape: f32[2,4,128], index: 1, kind: input, shape index: {}]
  %s2 = inlined_call_operand.vmem [shape: f32[2,8,2], index: 2, kind: output, shape index: {}]
  %s3 = sld [smem:[#allocation0]]
  $region49: #{cbr_forward.2} parent=0
    _
  %s5 = ssub.s32 1, %s3
  %s6 = scalar_select 0, %s5, %s3
  loop: start=0, step=1, limit=4
  $region2: #{cbr_forward.2} parent=0 // loop_pre_header
    _
  $region3: #{cbr_forward.2} parent=0 // loop_header
    %s8 = sphi 0, %s12
    %p9 = scmp.ge.s32.totalorder %s8, 4
    %s15 = sphi 0, %s27
    %s16 = sphi 0, %s23
    %s17 = sphi 0, %s15
    %s18 = sphi 0, %s16
    %s19 = sphi 0, %s17
    %s20 = sphi 0, %s18
    %s28 = sphi 0, %s28
    %s30 = sphi 0, %s28
    %s31 = sphi 0, %s30
    %s45 = sphi 0, %s31
    %s53 = sphi 0, %s55
    %s56 = sphi 0, %s53
    %s57 = sphi 0, %s56
    %s73 = sphi 0, %s57
    %s79 = sphi 0, %s81
    %s82 = sphi 0, %s79
    %s83 = sphi 0, %s82
    %s99 = sphi 0, %s83
  $region4: #{cbr_forward.2} parent=0 // loop_header_branch
    %11 = sbr.rel (%p9) target = $region8
  $region5: #{cbr_forward.2} parent=0 // loop_body
    %s13 = ssub.s32 %s8, 1
    %s14 = ssub.s32 %s8, 2
    %s21 = sadd.s32 1, %s16
    %p22 = scmp.ge.s32.totalorder %s21, 1
    %s23 = scalar_select %p22, 0, %s21
    %s24 = sadd.s32 1, %s15
    %s25 = scalar_select %p22, %s24, %s15
    %p26 = scmp.ge.s32.totalorder %s25, 2
    %s27 = scalar_select %p26, 0, %s25
    %s29 = sadd.s32 %s28, 1
    %p32 = scmp.eq.s32.totalorder %s8, 1
    %p33 = scmp.ne.s32.totalorder %s28, %s30
    %p34 = scmp.eq.s32.totalorder %s8, 0
    %p35 = por %p33, %p34
    %p36 = scmp.ne.s32.totalorder %s28, %s30
    %p37 = scmp.eq.s32.totalorder %s13, 1
    %p38 = por %p36, %p37
    %p39 = scmp.ne.s32.totalorder %s30, %s31
    %p40 = scmp.eq.s32.totalorder %s13, 0
    %p41 = por %p39, %p40
    %p42 = scmp.ne.s32.totalorder %s30, %s31
    %p43 = scmp.eq.s32.totalorder %s14, 1
    %p44 = por %p42, %p43
    %p46 = scmp.ne.s32.totalorder %s31, %s45
    %p47 = scmp.eq.s32.totalorder %s14, 0
    %p48 = por %p46, %p47
    %s49 = ssub.s32 %s15, %s27
    %s50 = ssub.s32 %s16, %s23
    %s51 = sor.u32 %s49, %s50
    %p52 = scmp.eq.s32.totalorder %s51, 0
    %s54 = sadd.s32 %s53, 1
    %s55 = scalar_select %p52, %s53, %s54
    %p58 = pneg %p52
    %p59 = scmp.eq.s32.totalorder %s8, 1
    %p60 = por %p58, %p59
    %p61 = scmp.ne.s32.totalorder %s53, %s56
    %p62 = scmp.eq.s32.totalorder %s8, 0
    %p63 = por %p61, %p62
    %p64 = scmp.ne.s32.totalorder %s53, %s56
    %p65 = scmp.eq.s32.totalorder %s13, 1
    %p66 = por %p64, %p65
    %p67 = scmp.ne.s32.totalorder %s56, %s57
    %p68 = scmp.eq.s32.totalorder %s13, 0
    %p69 = por %p67, %p68
    %p70 = scmp.ne.s32.totalorder %s56, %s57
    %p71 = scmp.eq.s32.totalorder %s14, 1
    %p72 = por %p70, %p71
    %p74 = scmp.ne.s32.totalorder %s57, %s73
    %p75 = scmp.eq.s32.totalorder %s14, 0
    %p76 = por %p74, %p75
    %s77 = ssub.s32 %s15, %s27
    %p78 = scmp.eq.s32.totalorder %s77, 0
    %s80 = sadd.s32 %s79, 1
    %s81 = scalar_select %p78, %s79, %s80
    %p84 = pneg %p78
    %p85 = scmp.eq.s32.totalorder %s8, 1
    %p86 = por %p84, %p85
    %p87 = scmp.ne.s32.totalorder %s79, %s82
    %p88 = scmp.eq.s32.totalorder %s8, 0
    %p89 = por %p87, %p88
    %p90 = scmp.ne.s32.totalorder %s79, %s82
    %p91 = scmp.eq.s32.totalorder %s13, 1
    %p92 = por %p90, %p91
    %p93 = scmp.ne.s32.totalorder %s82, %s83
    %p94 = scmp.eq.s32.totalorder %s13, 0
    %p95 = por %p93, %p94
    %p96 = scmp.ne.s32.totalorder %s82, %s83
    %p97 = scmp.eq.s32.totalorder %s14, 1
    %p98 = por %p96, %p97
    %p100 = scmp.ne.s32.totalorder %s83, %s99
    %p101 = scmp.eq.s32.totalorder %s14, 0
    %p102 = por %p100, %p101
    %p103 = scmp.le.s32.totalorder 1, %s8
    %p104 = scmp.lt.s32.totalorder %s8, 3
    %p105 = pnand %p103, %p104
    %p106 = pneg %p105
    // Predicated region
    $region9: #{cbr_forward.2} parent=5 // pred_check
      _
    $region10: #{cbr_forward.2} parent=5 // pred_check_branch
      %108 = sbr.rel (%p105) target = $region12
    $region11: #{cbr_forward.2} parent=5 // pred_region
      %s109 = ssub.s32 %s8, 1
      // Predicated region
      $region13: #{cbr_forward.2} parent=11 // pred_check
        %p110 = pneg %p41
      $region14: #{cbr_forward.2} parent=11 // pred_check_branch
        %112 = sbr.rel (%p110) target = $region16
      $region15: #{cbr_forward.2} parent=11 // pred_region
        _
      $region16: #{cbr_forward.2} parent=11 // pred_fallthru
        _
    $region12: #{cbr_forward.2} parent=5 // pred_fallthru
      _
    %p113 = scmp.lt.s32.totalorder %s8, 2
    // Predicated region
    $region17: #{cbr_forward.2} parent=5 // pred_check
      %p114 = pneg %p113
    $region18: #{cbr_forward.2} parent=5 // pred_check_branch
      %116 = sbr.rel (%p114) target = $region20
    $region19: #{cbr_forward.2} parent=5 // pred_region
      // Predicated region
      $region21: #{cbr_forward.2} parent=19 // pred_check
        %p117 = pneg %p63
      $region22: #{cbr_forward.2} parent=19 // pred_check_branch
        %119 = sbr.rel (%p117) target = $region24
      $region23: #{cbr_forward.2} parent=19 // pred_region
        %p120 = scmp.lt.s32.totalorder %s15, 1
        %s121 = scalar_select %p120, %s15, 1
        %p122 = scmp.lt.s32.totalorder %s16, 0
        %s123 = scalar_select %p122, %s16, 0
        %s124 = sadd.s32 %s123, %s121
        %s125 = smul.addr %s124, 4
        %s126 = scalar_lea.vmem %s1, %s125
      $region24: #{cbr_forward.2} parent=19 // pred_fallthru
        _
    $region20: #{cbr_forward.2} parent=5 // pred_fallthru
      _
    %p127 = scmp.le.s32.totalorder 1, %s8
    %p128 = scmp.lt.s32.totalorder %s8, 3
    %p129 = pnand %p127, %p128
    %p130 = pneg %p129
    // Predicated region
    $region25: #{cbr_forward.2} parent=5 // pred_check
      _
    $region26: #{cbr_forward.2} parent=5 // pred_check_branch
      %132 = sbr.rel (%p129) target = $region28
    $region27: #{cbr_forward.2} parent=5 // pred_region
      %s133 = ssub.s32 %s8, 1
      %p134 = pneg %p41
      %p135 = pneg %p38
      %p136 = scmp.lt.s32.totalorder %s17, 1
      %s137 = scalar_select %p136, %s17, 1
      %p138 = scmp.lt.s32.totalorder %s18, 0
      %s139 = scalar_select %p138, %s18, 0
      %s140 = sadd.s32 %s139, %s137
      %s141 = smul.addr %s140, 4
      %s142 = scalar_lea.vmem %s1, %s141
      %p143 = pneg %p69
      %p144 = pneg %p66
      %p145 = pneg %p95
      %p146 = pneg %p92
      %p147 = scmp.lt.s32.totalorder %s17, 1
      %s148 = scalar_select %p147, %s17, 1
      %s149 = smul.addr %s148, 8
      %s150 = scalar_lea.vmem %s2, %s149
      %p151 = scmp.lt.s32.totalorder %s17, 1
      %s152 = scalar_select %p151, %s17, 1
      %p153 = scmp.lt.s32.totalorder %s18, 0
      %s154 = scalar_select %p153, %s18, 0
      %s155 = sadd.s32 %s154, %s152
      %s156 = smul.addr %s155, 4
      %s157 = scalar_lea.vmem %s1, %s156
      %p158 = scmp.lt.s32.totalorder %s17, 1
      %s159 = scalar_select %p158, %s17, 1
      %s160 = smul.addr %s159, 8
      %s161 = scalar_lea.vmem %s2, %s160
      %p162 = scmp.eq.s32.totalorder %s18, 0
      // Predicated region
      $region29: #{cbr_forward.2} parent=27 // pred_check
        %p163 = pneg %p162
      $region30: #{cbr_forward.2} parent=27 // pred_check_branch
        %165 = sbr.rel (%p163) target = $region32
      $region31: #{cbr_forward.2} parent=27 // pred_region
        %vm166 = vcmask 7168
        %167 = vst.msk [vmem:[#allocation2] sm:$0xff] %vm166, 0.0
        %168 = vst.msk [vmem:[#allocation3] sm:$0xff] %vm166, 0.0
      $region32: #{cbr_forward.2} parent=27 // pred_fallthru
        _
      %v169 = vld [vmem:[%s0] sm:$0xff]
      %v170 = vld [vmem:[%s157] sm:$0xf]
      %vm171 = vcmask 31744
      %v173 = vsel %vm171, %v169, 0
      %vm175 = vcmask 1043456
      %v177 = vsel %vm175, %v170, 0
      %179 = vmatprep.subr.mxu0 0.0
      %180 = vmatpush1.msra.mxu0 0.0
      %181 = vmatprep.subr.mxu0 0.0
      %182 = vmatpush1.msra.mxu0 0.0
      %183 = vmatprep.subr.mxu0 0.0
      %184 = vmatpush1.msra.mxu0 0.0
      %185 = vmatprep.subr.mxu0 0.0
      %186 = vmatpush1.msra.mxu0 0.0
      %187 = vmatprep.subr.mxu0 0.0
      %188 = vmatpush1.msra.mxu0 0.0
      %189 = vmatprep.subr.mxu0 0.0
      %190 = vmatpush1.msra.mxu0 0.0
      %191 = vmatprep.subr.mxu0 0.0
      %192 = vmatpush1.msra.mxu0 0.0
      %193 = vmatprep.subr.mxu0 0.0
      %194 = vmatpush1.msra.mxu0 0.0
      %195 = vmatprep.subr.mxu0 0.0
      %196 = vmatpush1.msra.mxu0 0.0
      %197 = vmatprep.subr.mxu0 0.0
      %198 = vmatpush1.msra.mxu0 0.0
      %199 = vmatprep.subr.mxu0 0.0
      %200 = vmatpush1.msra.mxu0 0.0
      %201 = vmatprep.subr.mxu0 0.0
      %202 = vmatpush1.msra.mxu0 0.0
      %203 = vmatprep.subr.mxu0 0.0
      %204 = vmatpush1.msra.mxu0 0.0
      %205 = vmatprep.subr.mxu0 0.0
      %206 = vmatpush1.msra.mxu0 0.0
      %207 = vmatprep.subr.mxu0 0.0
      %208 = vmatpush1.msra.mxu0 0.0
      %209 = vmatprep.subr.mxu0 0.0
      %210 = vmatpush1.msra.mxu0 %v177
      %211 = vmatprep.subr.mxu0 0.0
      %212 = vmatpush2.msra.mxu0 0.0
      %213 = vmatprep.subr.mxu0 0.0
      %214 = vmatpush2.msra.mxu0 0.0
      %215 = vmatprep.subr.mxu0 0.0
      %216 = vmatpush2.msra.mxu0 0.0
      %217 = vmatprep.subr.mxu0 0.0
      %218 = vmatpush2.msra.mxu0 0.0
      %219 = vmatprep.subr.mxu0 0.0
      %220 = vmatpush2.msra.mxu0 0.0
      %221 = vmatprep.subr.mxu0 0.0
      %222 = vmatpush2.msra.mxu0 0.0
      %223 = vmatprep.subr.mxu0 0.0
      %224 = vmatpush2.msra.mxu0 0.0
      %225 = vmatprep.subr.mxu0 0.0
      %226 = vmatpush2.msra.mxu0 0.0
      %227 = vmatprep.subr.mxu0 0.0
      %228 = vmatpush2.msra.mxu0 0.0
      %229 = vmatprep.subr.mxu0 0.0
      %230 = vmatpush2.msra.mxu0 0.0
      %231 = vmatprep.subr.mxu0 0.0
      %232 = vmatpush2.msra.mxu0 0.0
      %233 = vmatprep.subr.mxu0 0.0
      %234 = vmatpush2.msra.mxu0 0.0
      %235 = vmatprep.subr.mxu0 0.0
      %236 = vmatpush2.msra.mxu0 0.0
      %237 = vmatprep.subr.mxu0 0.0
      %238 = vmatpush2.msra.mxu0 0.0
      %239 = vmatprep.subr.mxu0 0.0
      %240 = vmatpush2.msra.mxu0 0.0
      %241 = vmatprep.subr.mxu0 0.0
      %242 = vmatpush2.msra.mxu0 0.0
      %243 = vmatprep.mubr.f32.mxu0 0.0
      %244 = vmatmul.mubr.f32.gmra.mxu0 %v173
      %v245 = vpop.f32.mrf.mxu0
      %v246 = vadd.f32 0.0, %v245
      %v247 = vpop.f32.mrf.mxu0
      %248 = vdwg.mxu0
      %v249 = vld [vmem:[#allocation2] sm:$0xff]
      %250 = vadd.xlane.f32.xlu0 %v246
      %v251 = vpop.xlane.xlu0 %250
      %v252 = vadd.f32 %v249, %v251
      %vm253 = vcmask 7168
      %254 = vst.msk [vmem:[#allocation2] sm:$0xff] %vm253, %v252
      %v255 = vld [vmem:[#allocation3] sm:$0xff]
      %v256 = vmul.f32 %v246, %v246
      %257 = vadd.xlane.f32.xlu0 %v256
      %v258 = vpop.xlane.xlu0 %257
      %v259 = vadd.f32 %v255, %v258
      %260 = vst.msk [vmem:[#allocation3] sm:$0xff] %vm253, %v259
      // Predicated region
      $region33: #{cbr_forward.2} parent=27 // pred_check
        %p261 = pneg %p162
      $region34: #{cbr_forward.2} parent=27 // pred_check_branch
        %263 = sbr.rel (%p261) target = $region36
      $region35: #{cbr_forward.2} parent=27 // pred_region
        %v264 = vld [vmem:[#allocation2] sm:$0xff]
        %265 = vst.msk [vmem:[%s161] sm:$0xff] %vm253, %v264
        %v266 = vld [vmem:[#allocation3] sm:$0xff]
        %268 = vrot.lane.b32.xlu0 %v266, 1
        %v269 = vpop.permute.xlu0 %268
        %vm271 = vcmask 15368
        %272 = vst.msk [vmem:[%s161] sm:$0xff] %vm271, %v269
      $region36: #{cbr_forward.2} parent=27 // pred_fallthru
        _
      %p273 = scmp.lt.s32.totalorder %s17, 1
      %s274 = scalar_select %p273, %s17, 1
      %s275 = smul.addr %s274, 8
      %s276 = scalar_lea.vmem %s2, %s275
      // Predicated region
      $region37: #{cbr_forward.2} parent=27 // pred_check
        %p277 = pneg %p92
      $region38: #{cbr_forward.2} parent=27 // pred_check_branch
        %279 = sbr.rel (%p277) target = $region40
      $region39: #{cbr_forward.2} parent=27 // pred_region
        _
      $region40: #{cbr_forward.2} parent=27 // pred_fallthru
        _
    $region28: #{cbr_forward.2} parent=5 // pred_fallthru
      _
    %p280 = scmp.le.s32.totalorder 2, %s8
    // Predicated region
    $region41: #{cbr_forward.2} parent=5 // pred_check
      %p281 = pneg %p280
    $region42: #{cbr_forward.2} parent=5 // pred_check_branch
      %283 = sbr.rel (%p281) target = $region44
    $region43: #{cbr_forward.2} parent=5 // pred_region
      %s284 = ssub.s32 %s8, 2
      // Predicated region
      $region45: #{cbr_forward.2} parent=43 // pred_check
        %p285 = pneg %p98
      $region46: #{cbr_forward.2} parent=43 // pred_check_branch
        %287 = sbr.rel (%p285) target = $region48
      $region47: #{cbr_forward.2} parent=43 // pred_region
        %p288 = scmp.lt.s32.totalorder %s19, 1
        %s289 = scalar_select %p288, %s19, 1
        %s290 = smul.addr %s289, 8
        %s291 = scalar_lea.vmem %s2, %s290
      $region48: #{cbr_forward.2} parent=43 // pred_fallthru
        _
    $region44: #{cbr_forward.2} parent=5 // pred_fallthru
      _
  $region6: #{cbr_forward.2} parent=0 // loop_footer
    %s12 = sadd.s32 1, %s8
  $region7: #{cbr_forward.2} parent=0 // loop_footer_branch
    %7 = sbr.rel target = $region3
  $region8: #{cbr_forward.2} parent=0 // loop_exit
    _

</llo_original>
